<compile_context>
chip_gen: v7x
topology: tpu7x:2x2x1
jax: 0.10.0
libtpu: 0.0.40
codegen_flags: <defaults>
</compile_context>

<pallas_src>
import functools

import jax
import jax.numpy as jnp
from jax.experimental import pallas as pl
from jax.experimental.pallas import tpu as pltpu

LANE = 128
MAX_ROW_BLK = 2048  # 2048 * 128 * 4 B = 1 MiB per f32 input buffer


def _round_up(a, b):
    return (a + b - 1) // b * b


def _focal_partial_kernel(x_ref, t_ref, o_ref, *, gamma):
    x = x_ref[...].astype(jnp.float32)
    t = t_ref[...].astype(jnp.float32)

    # Numerically-stable BCE with logits (matches torch):
    #   bce = max(x, 0) - x*t + log1p(exp(-|x|))
    bce = jnp.maximum(x, 0.0) - x * t + jnp.log1p(jnp.exp(-jnp.abs(x)))
    pt = jnp.exp(-bce)
    one_minus_pt = 1.0 - pt

    g_int = int(gamma)
    if float(g_int) == float(gamma) and g_int >= 0:
        # Integer gamma (default 2.0): repeated multiply instead of
        # jnp.power (= exp(gamma*log(.))) -> 2 fewer EUP transcendentals/elem.
        if g_int == 0:
            focal = bce
        else:
            w = one_minus_pt
            for _ in range(g_int - 1):
                w = w * one_minus_pt
            focal = w * bce
    else:
        focal = jnp.power(one_minus_pt, gamma) * bce

    # Reduce the (block_rows, 128) tile to a single (8, 128) vreg partial with
    # statically-sliced VPU adds (no reshape / no per-tile XLU reduce). The
    # cross-lane reduction over the tiny partials array happens in the wrapper.
    block_rows = focal.shape[0]
    partial = focal[0:8, :]
    for k in range(1, block_rows // 8):
        partial = partial + focal[k * 8:(k + 1) * 8, :]
    o_ref[0] = partial


def focal_loss(inputs, targets, gamma=2.0, alpha=None, reduction="mean"):
    """Binary focal loss with logits. inputs/targets: same shape (e.g. NCHW)."""
    assert inputs.shape == targets.shape
    if alpha is not None:
        # TODO(synk): alpha weighting (extra VMEM input) — default config uses None.
        raise NotImplementedError("alpha weighting not implemented in this kernel")
    if reduction not in ("mean", "sum"):
        # TODO(synk): reduction='none' needs an elementwise (non-reducing) kernel variant.
        raise NotImplementedError("only 'mean'/'sum' reductions are implemented")

    n = inputs.size
    x = inputs.reshape(-1).astype(jnp.float32)
    # bf16 targets: exact for 0/1 labels, halves target HBM traffic.
    t = targets.reshape(-1).astype(jnp.bfloat16)

    rows = pl.cdiv(n, LANE)
    if rows <= MAX_ROW_BLK:
        block_rows = _round_up(rows, 16)  # bf16 block: sublane multiple of 16
    else:
        block_rows = MAX_ROW_BLK
    padded_rows = _round_up(rows, block_rows)

    pad = padded_rows * LANE - n
    if pad:
        # Pad with (x=1000, t=1): bce == 0 exactly -> focal == 0, so the padded
        # elements contribute nothing to the sum (mean divides by the true n).
        x = jnp.concatenate([x, jnp.full((pad,), 1000.0, dtype=jnp.float32)])
        t = jnp.concatenate([t, jnp.ones((pad,), dtype=jnp.bfloat16)])

    x2d = x.reshape(padded_rows, LANE)
    t2d = t.reshape(padded_rows, LANE)
    num_blocks = padded_rows // block_rows

    kernel = functools.partial(_focal_partial_kernel, gamma=gamma)
    partials = pl.pallas_call(
        kernel,
        out_shape=jax.ShapeDtypeStruct((num_blocks, 8, LANE), jnp.float32),
        grid_spec=pltpu.PrefetchScalarGridSpec(
            num_scalar_prefetch=0,
            grid=(num_blocks,),
            in_specs=[
                pl.BlockSpec((block_rows, LANE), lambda i: (i, 0)),
                pl.BlockSpec((block_rows, LANE), lambda i: (i, 0)),
            ],
            out_specs=pl.BlockSpec((1, 8, LANE), lambda i: (i, 0, 0)),
        ),
        compiler_params=pltpu.CompilerParams(
            # Independent per-block partials -> parallel axis (megacore on v7x).
            dimension_semantics=("parallel",),
            # Raise v5e's 16 MiB default; safe on v6e/v7x as well.
            vmem_limit_bytes=32 * 1024 * 1024,
        ),
    )(x2d, t2d)

    total = jnp.sum(partials)
    if reduction == "mean":
        return total / jnp.float32(n)
    return total


def _focal_loss_ref(inputs, targets, gamma=2.0, reduction="mean"):
    x = inputs.astype(jnp.float32)
    t = targets.astype(jnp.float32)
    bce = jnp.maximum(x, 0.0) - x * t + jnp.log1p(jnp.exp(-jnp.abs(x)))
    pt = jnp.exp(-bce)
    focal = (1.0 - pt) ** gamma * bce
    return jnp.mean(focal) if reduction == "mean" else jnp.sum(focal)


if __name__ == "__main__":
    key = jax.random.PRNGKey(0)
    k1, k2, k3, k4 = jax.random.split(key, 4)

    # NCHW-style shape consistent with the module: batch=2, channels=4, 16x16.
    shape = (2, 4, 16, 16)
    inputs = jax.random.normal(k1, shape, dtype=jnp.float32)
    targets = (jax.random.uniform(k2, shape) > 0.5).astype(jnp.float32)
    out = jax.block_until_ready(focal_loss(inputs, targets, gamma=2.0, reduction="mean"))
    ref = _focal_loss_ref(inputs, targets, gamma=2.0, reduction="mean")
    assert jnp.allclose(out, ref, rtol=1e-5, atol=1e-5), (out, ref)

    # Non-divisible shape exercising the pad + neutral-element path.
    shape2 = (2, 3, 7, 5)
    x2 = jax.random.normal(k3, shape2, dtype=jnp.float32)
    t2 = (jax.random.uniform(k4, shape2) > 0.5).astype(jnp.float32)
    out2 = jax.block_until_ready(focal_loss(x2, t2, gamma=2.0, reduction="mean"))
    ref2 = _focal_loss_ref(x2, t2, gamma=2.0, reduction="mean")
    assert jnp.allclose(out2, ref2, rtol=1e-5, atol=1e-5), (out2, ref2)

    print("KERNEL_OK")
</pallas_src>

<mosaic_0001>
module attributes {stable_mosaic.version = 11 : i64} {
  func.func @_focal_partial_kernel(%arg0: i32, %arg1: memref<16x128xf32, #tpu.memory_space<vmem>>, %arg2: memref<16x128xbf16, #tpu.memory_space<vmem>>, %arg3: memref<1x8x128xf32, #tpu.memory_space<vmem>>) attributes {dimension_semantics = [#tpu.dimension_semantics<parallel>], iteration_bounds = array<i64: 1>, scalar_prefetch = 0 : i64, scratch_operands = 0 : i64, tpu.core_type = #tpu.core_type<tc>, window_params = [{transform_indices = @transform_0, window_bounds = array<i64: 16, 128>}, {transform_indices = @transform_1, window_bounds = array<i64: 16, 128>}, {transform_indices = @transform_2, window_bounds = array<i64: 1, 8, 128>}]} {
    %c0 = arith.constant 0 : index
    %c0_0 = arith.constant 0 : index
    %0 = vector.load %arg1[%c0, %c0_0] : memref<16x128xf32, #tpu.memory_space<vmem>>, vector<16x128xf32>
    %c0_1 = arith.constant 0 : index
    %c0_2 = arith.constant 0 : index
    %1 = vector.load %arg2[%c0_1, %c0_2] : memref<16x128xbf16, #tpu.memory_space<vmem>>, vector<16x128xbf16>
    %2 = arith.extf %1 : vector<16x128xbf16> to vector<16x128xf32>
    %cst = arith.constant 0.000000e+00 : f32
    %3 = vector.broadcast %cst : f32 to vector<16x128xf32>
    %4 = arith.maximumf %0, %3 : vector<16x128xf32>
    %5 = arith.mulf %0, %2 : vector<16x128xf32>
    %6 = arith.subf %4, %5 : vector<16x128xf32>
    %7 = math.absf %0 : vector<16x128xf32>
    %cst_3 = arith.constant 0.000000e+00 : f32
    %8 = vector.broadcast %cst_3 : f32 to vector<16x128xf32>
    %9 = arith.subf %8, %7 : vector<16x128xf32>
    %10 = math.exp %9 : vector<16x128xf32>
    %11 = math.log1p %10 : vector<16x128xf32>
    %12 = arith.addf %6, %11 : vector<16x128xf32>
    %cst_4 = arith.constant 0.000000e+00 : f32
    %13 = vector.broadcast %cst_4 : f32 to vector<16x128xf32>
    %14 = arith.subf %13, %12 : vector<16x128xf32>
    %15 = math.exp %14 : vector<16x128xf32>
    %cst_5 = arith.constant 1.000000e+00 : f32
    %16 = vector.broadcast %cst_5 : f32 to vector<16x128xf32>
    %17 = arith.subf %16, %15 : vector<16x128xf32>
    %18 = arith.mulf %17, %17 : vector<16x128xf32>
    %19 = arith.mulf %18, %12 : vector<16x128xf32>
    %20 = vector.extract_strided_slice %19 {offsets = [0, 0], sizes = [8, 128], strides = [1, 1]} : vector<16x128xf32> to vector<8x128xf32>
    %21 = vector.extract_strided_slice %19 {offsets = [8, 0], sizes = [8, 128], strides = [1, 1]} : vector<16x128xf32> to vector<8x128xf32>
    %22 = arith.addf %20, %21 : vector<8x128xf32>
    %c0_6 = arith.constant 0 : index
    %c0_7 = arith.constant 0 : index
    %c0_8 = arith.constant 0 : index
    %23 = vector.load %arg3[%c0_6, %c0_7, %c0_8] : memref<1x8x128xf32, #tpu.memory_space<vmem>>, vector<1x8x128xf32>
    %24 = vector.shape_cast %23 : vector<1x8x128xf32> to vector<8x128xf32>
    %25 = vector.shape_cast %22 : vector<8x128xf32> to vector<1x8x128xf32>
    tpu.vector_store %arg3[%c0_6, %c0_7, %c0_8], %25 {strides = array<i32>} : memref<1x8x128xf32, #tpu.memory_space<vmem>>, vector<1x8x128xf32>,
    return
  }
  func.func @transform_0(%arg0: i32) -> (i32, i32) {
    %c0_i32 = arith.constant 0 : i32
    %c0_i32_0 = arith.constant 0 : i32
    return %arg0, %c0_i32 : i32, i32
  }
  func.func @transform_1(%arg0: i32) -> (i32, i32) {
    %c0_i32 = arith.constant 0 : i32
    %c0_i32_0 = arith.constant 0 : i32
    return %arg0, %c0_i32 : i32, i32
  }
  func.func @transform_2(%arg0: i32) -> (i32, i32, i32) {
    %c0_i32 = arith.constant 0 : i32
    %c0_i32_0 = arith.constant 0 : i32
    %c0_i32_1 = arith.constant 0 : i32
    return %arg0, %c0_i32, %c0_i32_0 : i32, i32, i32
  }
}

</mosaic_0001>

<llo_original>
// kernel: tpu_custom_call.1
$region0: #{tpu_custom_call.1}
  #allocation0 [shape = 'u32[]', space=smem, size = 0x4, offset = 0x4, fixed_abs, tag = 'smem constant byte address 0x4 - core index']
  #allocation1 [shape = 'u32[144,128]{1,0:T(1,128)}', space=vmem, size = 0x12000, scoped, tag = 'internal scratch']
  %s0 = inlined_call_operand.hbm [shape: f32[16,128], index: 0, kind: input, shape index: {}]
  %s1 = inlined_call_operand.hbm [shape: bf16[16,128], index: 1, kind: input, shape index: {}]
  %s2 = inlined_call_operand.hbm [shape: f32[1,8,128], index: 2, kind: output, shape index: {}]
  %s3 = sld [smem:[#allocation0]]
  $region26: #{tpu_custom_call.1} parent=0
    _
  %s5 = ssub.s32 1, %s3
  %s6 = scalar_select 0, %s5, %s3
  $region1: #{tpu_custom_call.1} parent=0
    #allocation2 [shape = 'u8[8192]{0}', space=vmem, size = 0x2000, scoped, tag = 'input window, operand 0, single buffered']
    #allocation3 [shape = 's32[1]{0}', space=sflag, size = 0x4, scoped, tag = 'scoped memory for tpu_custom_call.1']
    #allocation4 [shape = 's32[1]{0}', space=sflag, size = 0x4, scoped, tag = 'scoped memory for tpu_custom_call.1']
    #allocation5 [shape = 'u8[4096]{0}', space=vmem, size = 0x1000, scoped, tag = 'input window, operand 1, single buffered']
    #allocation6 [shape = 's32[1]{0}', space=sflag, size = 0x4, scoped, tag = 'scoped memory for tpu_custom_call.1']
    #allocation7 [shape = 'u8[4096]{0}', space=vmem, size = 0x1000, scoped, tag = 'output window, operand 0, single buffered']
    %7 = vsyncpa [#allocation3], 0
    %8 = vsyncpa [#allocation6], 0
    %9 = vsyncpa [#allocation4], 0
    // Predicated region
    $region2: #{tpu_custom_call.1} parent=1 // pred_check
      _
    $region3: #{tpu_custom_call.1} parent=1 // pred_check_branch
      %11 = sbr.rel (0) target = $region5
    $region4: #{tpu_custom_call.1} parent=1 // pred_region
      %s13 = ssub.s32 256, 256
      %14 = vsyncadd [#allocation3], %s13
      %s15 = sshll.u32 [#allocation2], 4
      %s16 = int_to_ptr.vmem [resolvable:$true] %s15
      %21 = dma.hbm_to_vmem [thread:$0]  %s0, 256, %s16, [#allocation3], 128, 128, 8
    $region5: #{tpu_custom_call.1} parent=1 // pred_fallthru
      _
    // Predicated region
    $region6: #{tpu_custom_call.1} parent=1 // pred_check
      _
    $region7: #{tpu_custom_call.1} parent=1 // pred_check_branch
      %23 = sbr.rel (0) target = $region9
    $region8: #{tpu_custom_call.1} parent=1 // pred_region
      %s25 = ssub.s32 128, 128
      %26 = vsyncadd [#allocation6], %s25
      %s27 = sshll.u32 [#allocation5], 4
      %s28 = int_to_ptr.vmem [resolvable:$true] %s27
      %33 = dma.hbm_to_vmem [thread:$0]  %s1, 128, %s28, [#allocation6], 64, 64, 4
    $region9: #{tpu_custom_call.1} parent=1 // pred_fallthru
      _
    // Predicated region
    $region10: #{tpu_custom_call.1} parent=1 // pred_check
      _
    $region11: #{tpu_custom_call.1} parent=1 // pred_check_branch
      %35 = sbr.rel (0) target = $region13
    $region12: #{tpu_custom_call.1} parent=1 // pred_region
      %36 = dma.done [#allocation3], 256
    $region13: #{tpu_custom_call.1} parent=1 // pred_fallthru
      _
    // Predicated region
    $region14: #{tpu_custom_call.1} parent=1 // pred_check
      _
    $region15: #{tpu_custom_call.1} parent=1 // pred_check_branch
      %38 = sbr.rel (0) target = $region17
    $region16: #{tpu_custom_call.1} parent=1 // pred_region
      %39 = dma.done [#allocation6], 128
    $region17: #{tpu_custom_call.1} parent=1 // pred_fallthru
      _
    %v40 = vld [vmem:[#allocation2] sm:$0xff]
    %v41 = vld [vmem:[#allocation2 + $0x8] sm:$0xff]
    %v42 = vld [vmem:[#allocation5] sm:$0xf]
    %v43 = vld [vmem:[#allocation5 + $0x4] sm:$0xf]
    %v44 = vunpack.c.l.bf16 %v42
    %v45 = vunpack.c.l.bf16 %v43
    %v46 = vmax.f32 %v40, 0.0
    %v47 = vmax.f32 %v41, 0.0
    %v48 = vmul.f32 %v40, %v44
    %v49 = vmul.f32 %v41, %v45
    %v50 = vsub.f32 %v46, %v48
    %v51 = vsub.f32 %v47, %v49
    %v52 = vand.u32 2147483647, %v40
    %v53 = vand.u32 2147483647, %v41
    %v54 = vsub.f32 0.0, %v52
    %v55 = vsub.f32 0.0, %v53
    %v56 = vmul.f32 %v54, 1.442695
    %v57 = vpow.pop %v56
    %v58 = vmul.f32 %v55, 1.442695
    %v59 = vpow.pop %v58
    %v60 = vadd.f32 %v57, 1.0
    %v61 = vlog2.pop %v60
    %v62 = vmul.f32 %v61, 0.6931472
    %v63 = vmul.f32 -0.5, %v57
    %v64 = vadd.f32 %v63, 1.0
    %v65 = vmul.f32 %v64, %v57
    %v66 = vand.u32 2147483647, %v57
    %vm67 = vcmp.lt.f32.partialorder %v66, 0.0004427343
    %v68 = vsel %vm67, %v65, %v62
    %v69 = vadd.f32 %v59, 1.0
    %v70 = vlog2.pop %v69
    %v71 = vmul.f32 %v70, 0.6931472
    %v72 = vmul.f32 -0.5, %v59
    %v73 = vadd.f32 %v72, 1.0
    %v74 = vmul.f32 %v73, %v59
    %v75 = vand.u32 2147483647, %v59
    %vm76 = vcmp.lt.f32.partialorder %v75, 0.0004427343
    %v77 = vsel %vm76, %v74, %v71
    %v78 = vadd.f32 %v50, %v68
    %v79 = vadd.f32 %v51, %v77
    %v80 = vsub.f32 0.0, %v78
    %v81 = vsub.f32 0.0, %v79
    %v82 = vmul.f32 %v80, 1.442695
    %v83 = vpow.pop %v82
    %v84 = vmul.f32 %v81, 1.442695
    %v85 = vpow.pop %v84
    %v86 = vsub.f32 1.0, %v83
    %v87 = vsub.f32 1.0, %v85
    %v88 = vmul.f32 %v86, %v86
    %v89 = vmul.f32 %v87, %v87
    %v90 = vmul.f32 %v88, %v78
    %v91 = vmul.f32 %v89, %v79
    %v92 = vadd.f32 %v90, %v91
    %93 = vst [vmem:[#allocation7] sm:$0xff] %v92
    // Predicated region
    $region18: #{tpu_custom_call.1} parent=1 // pred_check
      _
    $region19: #{tpu_custom_call.1} parent=1 // pred_check_branch
      %95 = sbr.rel (0) target = $region21
    $region20: #{tpu_custom_call.1} parent=1 // pred_region
      %s97 = ssub.s32 128, 128
      %98 = vsyncadd [#allocation4], %s97
      %s100 = sshll.u32 [#allocation7], 4
      %s101 = int_to_ptr.vmem [resolvable:$true] %s100
      %103 = dma.vmem_to_hbm [thread:$0]  %s101, 128, %s2, [#allocation4]
    $region21: #{tpu_custom_call.1} parent=1 // pred_fallthru
      _
    // Predicated region
    $region22: #{tpu_custom_call.1} parent=1 // pred_check
      _
    $region23: #{tpu_custom_call.1} parent=1 // pred_check_branch
      %105 = sbr.rel (0) target = $region25
    $region24: #{tpu_custom_call.1} parent=1 // pred_region
      %106 = dma.done [#allocation4], 128
    $region25: #{tpu_custom_call.1} parent=1 // pred_fallthru
      _
    %107 = vsyncpa [#allocation3], 1
    %108 = vsyncpa [#allocation6], 1
    %109 = vsyncpa [#allocation4], 1

</llo_original>
